<compile_context>
chip_gen: v5e
topology: v5e:2x2
jax: 0.10.0
libtpu: 0.0.40
codegen_flags: <defaults>
</compile_context>

<pallas_src>
from typing import Callable, List, Sequence, Tuple

import jax
import jax.numpy as jnp
from jax.experimental import pallas as pl
from jax.experimental.pallas import tpu as pltpu


def _round_up(x: int, m: int) -> int:
    return (x + m - 1) // m * m


# ----------------------------------------------------------------------------
# Parameter packing: every layer (incl. the final Linear(h,1)) into one slab
# ----------------------------------------------------------------------------
def pack_critic_params(
    params: List[Tuple[jnp.ndarray, jnp.ndarray]],
    dtype=jnp.float32,
):
    """Packs [(W(in,out), b(out,)), ...] into one (R, >=128) lane-aligned slab.

    Layer i occupies rows [r_i, r_i+out_i):
        cols [0, in_i)  = W_i^T
        col  in_i       = b_i
    Row offsets are multiples of 8 (sublane aligned).  Returns
    (slab, [(row_offset, out_i, in_i), ...]) with static int metadata.
    """
    assert len(params) >= 1
    lane = 128
    max_in = max(w.shape[0] for w, _ in params)
    cols = _round_up(max_in + 1, lane)

    blocks, meta, r = [], [], 0
    for w, b in params:
        in_i, out_i = w.shape
        rows = _round_up(out_i, 8)
        blk = jnp.zeros((rows, cols), dtype)
        blk = blk.at[:out_i, :in_i].set(w.T.astype(dtype))
        blk = blk.at[:out_i, in_i].set(b.reshape(out_i).astype(dtype))
        blocks.append(blk)
        meta.append((r, out_i, in_i))
        r += rows

    slab = jnp.concatenate(blocks, axis=0)
    return slab, meta


# ----------------------------------------------------------------------------
# Kernel
# ----------------------------------------------------------------------------
def _make_critic_kernel(
    layer_meta: Sequence[Tuple[int, int, int]],
    activations: Sequence[Callable[[jnp.ndarray], jnp.ndarray]],
    compute_dtype,
):
    n_layers = len(layer_meta)
    assert len(activations) == n_layers - 1

    def kernel(x_ref, p_ref, o_ref):
        # x_ref: (TB, obs_dim)  observation tile in its natural layout
        # p_ref: (R, C)         packed parameter slab, VMEM-resident (const idx)
        # o_ref: (1, TB)        values for this batch tile (lane-dense store)
        x = x_ref[...].astype(compute_dtype)

        h = None
        z = None
        for li, (row, out_i, in_i) in enumerate(layer_meta):
            wT = p_ref[row:row + out_i, 0:in_i]          # (out, in)  static slice
            b = p_ref[row:row + out_i, in_i:in_i + 1]    # (out, 1) -> lane bcast
            if li == 0:
                # Feature-major flip fused into the first MXU matmul:
                # contract the last axis of both operands ("nt" matmul), so no
                # wrapper transpose and no extra HBM pass over the observation.
                z = jnp.einsum("oi,bi->ob", wT, x,
                               preferred_element_type=jnp.float32)
            else:
                # (out, in) @ (in, TB) -> (out, TB); batch stays on lanes.
                z = jnp.dot(wT, h, preferred_element_type=jnp.float32)
            z = z + b.astype(jnp.float32)
            if li < n_layers - 1:
                # Activation / elementwise math in f32 (v5e has no bf16 VPU),
                # MXU operands for the next layer in compute_dtype.
                h = activations[li](z).astype(compute_dtype)

        # Last layer has out=1 -> z is already the lane-dense (1, TB) value row.
        o_ref[...] = z.astype(o_ref.dtype)

    return kernel


# ----------------------------------------------------------------------------
# Wrapper
# ----------------------------------------------------------------------------
def critic_forward(
    observation: jnp.ndarray,
    params: List[Tuple[jnp.ndarray, jnp.ndarray]],
    activations: Sequence[Callable[[jnp.ndarray], jnp.ndarray]],
    *,
    batch_tile: int = None,
    compute_dtype=jnp.float32,   # jnp.bfloat16 recommended on v6e/v7x
) -> jnp.ndarray:
    """Critic MLP forward pass: (B, obs_dim) -> (B, 1)."""
    obs = jnp.asarray(observation)
    if obs.dtype not in (jnp.float32, jnp.bfloat16):
        obs = obs.astype(jnp.float32)
    batch, obs_dim = obs.shape
    assert len(params) == len(activations) + 1

    # ---- Tile sizing -------------------------------------------------------
    # Large lane-aligned tiles amortize the ~0.35us per-grid-step overhead;
    # per-tile VMEM is tiny (obs + intermediates + slab << 1 MiB at tb=2048),
    # so no extra buffering / vmem_limit tuning is needed on any generation.
    if batch_tile is None:
        batch_tile = 2048
    b_up = _round_up(max(batch, 1), 128)
    tb = min(_round_up(batch_tile, 128), b_up)
    # Guarantee >= 2 grid steps when the batch allows it, so the "parallel"
    # axis can shard across both TensorCores on v7x.
    if b_up >= 256 and tb > b_up // 2:
        tb = max(128, (b_up // 2) // 128 * 128)
    b_pad = _round_up(batch, tb)
    num_tiles = b_pad // tb

    slab, layer_meta = pack_critic_params(params, dtype=compute_dtype)

    # Pad the batch only when needed (zero-pad keeps padded lanes finite even
    # through tanh).  For batches that are already tile multiples this is free;
    # there is never a transposed HBM round-trip anymore.
    obs_p = obs if b_pad == batch else jnp.pad(obs, ((0, b_pad - batch), (0, 0)))

    kernel = _make_critic_kernel(layer_meta, activations, compute_dtype)

    flops_per_row = sum(2 * i * o for (_, o, i) in layer_meta)
    cost = pl.CostEstimate(
        flops=b_pad * flops_per_row,
        transcendentals=b_pad * sum(o for (_, o, _) in layer_meta[:-1]),
        bytes_accessed=int(
            obs_p.size * obs_p.dtype.itemsize
            + slab.size * slab.dtype.itemsize
            + b_pad * 4
        ),
    )

    out = pl.pallas_call(
        kernel,
        out_shape=jax.ShapeDtypeStruct((1, b_pad), jnp.float32),
        grid=(num_tiles,),
        in_specs=[
            # Observation: tiled over the batch grid -> auto double-buffered.
            pl.BlockSpec((tb, obs_dim), lambda i: (i, 0)),
            # Packed parameters: constant block index -> fetched once, resident.
            # (Single-buffering via pipeline_mode would save only ~slab-size
            #  bytes of VMEM; skipped as it is negligible at these sizes.)
            pl.BlockSpec(slab.shape, lambda i: (0, 0)),
        ],
        # Lane-disjoint output blocks: each grid step / TensorCore writes its
        # own 128-aligned lane range of the single value row -> unmasked
        # stores, no shared-tile read-modify-write across cores.
        out_specs=pl.BlockSpec((1, tb), lambda i: (0, i)),
        compiler_params=pltpu.CompilerParams(
            dimension_semantics=("parallel",),   # megacore sharding on v7x
        ),
        cost_estimate=cost,
    )(obs_p, slab)

    # (1, B_pad) lane-dense slab -> (B, 1); pure layout plumbing.
    return out[0, :batch].reshape(batch, 1).astype(jnp.float32)


# ----------------------------------------------------------------------------
# Deterministic parameter construction + pure-JAX reference
# ----------------------------------------------------------------------------
def init_critic_params(key, observation_dim: int, hidden_sizes: List[int]):
    sizes = [observation_dim] + hidden_sizes + [1]
    params = []
    for fan_in, fan_out in zip(sizes[:-1], sizes[1:]):
        key, kw, kb = jax.random.split(key, 3)
        bound = 1.0 / (fan_in ** 0.5)
        w = jax.random.uniform(kw, (fan_in, fan_out), jnp.float32, -bound, bound)
        b = jax.random.uniform(kb, (fan_out,), jnp.float32, -bound, bound)
        params.append((w, b))
    return params


def critic_reference(observation, params, activations):
    """Pure-JAX reference mirroring torch.nn.Sequential semantics."""
    h = jnp.asarray(observation, jnp.float32)
    for li, (w, b) in enumerate(params):
        h = h @ w + b
        if li < len(activations):
            h = activations[li](h)
    return h


# ----------------------------------------------------------------------------
# Main
# ----------------------------------------------------------------------------
if __name__ == "__main__":
    # Shapes consistent with Critic.__init__:
    #   observation_dim=16, hidden_sizes=[32, 32],
    #   hidden_activations=[ReLU, Tanh], final Linear(32, 1).
    observation_dim = 16
    hidden_sizes = [32, 32]
    activations = [
        lambda x: jnp.maximum(x, 0.0),  # torch.nn.ReLU
        jnp.tanh,                       # torch.nn.Tanh
    ]

    key = jax.random.PRNGKey(0)
    key_obs, key_params = jax.random.split(key)
    params = init_critic_params(key_params, observation_dim, hidden_sizes)

    # --- small batch (single tile, padded batch path) -----------------------
    batch = 8
    observation = jax.random.normal(key_obs, (batch, observation_dim), jnp.float32)
    value = jax.block_until_ready(critic_forward(observation, params, activations))
    ref = critic_reference(observation, params, activations)
    assert value.shape == (batch, 1), value.shape
    assert jnp.allclose(value, ref, atol=2e-5, rtol=1e-5), (value, ref)

    # --- larger batch (multi-tile "parallel" grid, no padding) --------------
    batch2 = 384
    obs2 = jax.random.normal(jax.random.PRNGKey(1), (batch2, observation_dim),
                             jnp.float32)
    ref2 = critic_reference(obs2, params, activations)
    v2 = jax.block_until_ready(critic_forward(obs2, params, activations))
    assert v2.shape == (batch2, 1), v2.shape
    assert jnp.allclose(v2, ref2, atol=2e-5, rtol=1e-5)

    # --- bf16 compute path (looser tolerance: bf16 weight/input quantization)
    v2_bf16 = jax.block_until_ready(
        critic_forward(obs2, params, activations, compute_dtype=jnp.bfloat16))
    assert jnp.allclose(v2_bf16, ref2, atol=5e-2, rtol=5e-2)

    print("KERNEL_OK")
</pallas_src>

<mosaic_0001>
module attributes {stable_mosaic.version = 11 : i64} {
  func.func @kernel(%arg0: i32, %arg1: memref<128x16xf32, #tpu.memory_space<vmem>>, %arg2: memref<72x128xf32, #tpu.memory_space<vmem>>, %arg3: memref<1x128xf32, #tpu.memory_space<vmem>>) attributes {dimension_semantics = [#tpu.dimension_semantics<parallel>], iteration_bounds = array<i64: 1>, scalar_prefetch = 0 : i64, scratch_operands = 0 : i64, tpu.core_type = #tpu.core_type<tc>, window_params = [{transform_indices = @transform_0, window_bounds = array<i64: 128, 16>}, {pipeline_mode = #tpu.pipeline_mode<synchronous>, transform_indices = @transform_1, window_bounds = array<i64: 72, 128>}, {transform_indices = @transform_2, window_bounds = array<i64: 1, 128>}]} {
    %c0 = arith.constant 0 : index
    %c0_0 = arith.constant 0 : index
    %0 = vector.load %arg1[%c0, %c0_0] : memref<128x16xf32, #tpu.memory_space<vmem>>, vector<128x16xf32>
    %c0_1 = arith.constant 0 : index
    %c0_2 = arith.constant 0 : index
    %1 = vector.load %arg2[%c0_1, %c0_2] : memref<72x128xf32, #tpu.memory_space<vmem>>, vector<32x16xf32>
    %c0_3 = arith.constant 0 : index
    %c16 = arith.constant 16 : index
    %2 = vector.load %arg2[%c0_3, %c16] : memref<72x128xf32, #tpu.memory_space<vmem>>, vector<32x1xf32>
    "tpu.trace_start"() <{level = 10 : i32, message = "oi,bi->ob"}> : () -> ()
    %cst = arith.constant dense<0.000000e+00> : vector<32x128xf32>
    %3 = tpu.matmul %1, %0, %cst {dimension_numbers = #tpu.dot_dimension_numbers<[1], [1], [0], [0], [0, 0, 1, 0], [], []>} : vector<32x16xf32>, vector<128x16xf32>, vector<32x128xf32> -> vector<32x128xf32>
    "tpu.trace_stop"() : () -> ()
    %4 = vector.broadcast %2 : vector<32x1xf32> to vector<32x128xf32>
    %5 = arith.addf %3, %4 : vector<32x128xf32>
    %cst_4 = arith.constant 0.000000e+00 : f32
    %6 = vector.broadcast %cst_4 : f32 to vector<32x128xf32>
    %7 = arith.maximumf %5, %6 : vector<32x128xf32>
    %c32 = arith.constant 32 : index
    %c0_5 = arith.constant 0 : index
    %8 = vector.load %arg2[%c32, %c0_5] : memref<72x128xf32, #tpu.memory_space<vmem>>, vector<32x32xf32>
    %c32_6 = arith.constant 32 : index
    %c32_7 = arith.constant 32 : index
    %9 = vector.load %arg2[%c32_6, %c32_7] : memref<72x128xf32, #tpu.memory_space<vmem>>, vector<32x1xf32>
    %cst_8 = arith.constant dense<0.000000e+00> : vector<32x128xf32>
    %10 = tpu.matmul %8, %7, %cst_8 {dimension_numbers = #tpu.dot_dimension_numbers<[1], [0], [0], [1], [0, 0, 1, 1], [], []>} : vector<32x32xf32>, vector<32x128xf32>, vector<32x128xf32> -> vector<32x128xf32>
    %11 = vector.broadcast %9 : vector<32x1xf32> to vector<32x128xf32>
    %12 = arith.addf %10, %11 : vector<32x128xf32>
    %13 = math.tanh %12 : vector<32x128xf32>
    %c64 = arith.constant 64 : index
    %c0_9 = arith.constant 0 : index
    %14 = vector.load %arg2[%c64, %c0_9] : memref<72x128xf32, #tpu.memory_space<vmem>>, vector<1x32xf32>
    %c64_10 = arith.constant 64 : index
    %c32_11 = arith.constant 32 : index
    %15 = vector.load %arg2[%c64_10, %c32_11] : memref<72x128xf32, #tpu.memory_space<vmem>>, vector<1x1xf32>
    %cst_12 = arith.constant dense<0.000000e+00> : vector<1x128xf32>
    %16 = tpu.matmul %14, %13, %cst_12 {dimension_numbers = #tpu.dot_dimension_numbers<[1], [0], [0], [1], [0, 0, 1, 1], [], []>} : vector<1x32xf32>, vector<32x128xf32>, vector<1x128xf32> -> vector<1x128xf32>
    %17 = vector.broadcast %15 : vector<1x1xf32> to vector<1x128xf32>
    %18 = arith.addf %16, %17 : vector<1x128xf32>
    %c0_13 = arith.constant 0 : index
    %c0_14 = arith.constant 0 : index
    %19 = vector.load %arg3[%c0_13, %c0_14] : memref<1x128xf32, #tpu.memory_space<vmem>>, vector<1x128xf32>
    tpu.vector_store %arg3[%c0_13, %c0_14], %18 {strides = array<i32>} : memref<1x128xf32, #tpu.memory_space<vmem>>, vector<1x128xf32>,
    return
  }
  func.func @transform_0(%arg0: i32) -> (i32, i32) {
    %c0_i32 = arith.constant 0 : i32
    %c0_i32_0 = arith.constant 0 : i32
    return %arg0, %c0_i32 : i32, i32
  }
  func.func @transform_1(%arg0: i32) -> (i32, i32) {
    %c0_i32 = arith.constant 0 : i32
    %c0_i32_0 = arith.constant 0 : i32
    %c0_i32_1 = arith.constant 0 : i32
    return %c0_i32, %c0_i32_0 : i32, i32
  }
  func.func @transform_2(%arg0: i32) -> (i32, i32) {
    %c0_i32 = arith.constant 0 : i32
    %c0_i32_0 = arith.constant 0 : i32
    return %c0_i32, %arg0 : i32, i32
  }
}

</mosaic_0001>

<llo_original>
// kernel: tpu_custom_call.1
$region0: #{tpu_custom_call.1}
  #allocation0 [shape = 'u32[]', space=smem, size = 0x4, offset = 0x4, fixed_abs, tag = 'smem constant byte address 0x4 - core index']
  #allocation1 [shape = 'u32[72,128]{1,0:T(1,128)}', space=vmem, size = 0x9000, scoped, tag = 'internal scratch']
  %s0 = inlined_call_operand.vmem [shape: f32[128,16], index: 0, kind: input, shape index: {}]
  %s1 = inlined_call_operand.vmem [shape: f32[72,128], index: 1, kind: input, shape index: {}]
  %s2 = inlined_call_operand.hbm [shape: f32[1,128], index: 2, kind: output, shape index: {}]
  %s3 = sld [smem:[#allocation0]]
  $region18: #{tpu_custom_call.1} parent=0
    _
  %s5 = ssub.s32 1, %s3
  %s6 = scalar_select 0, %s5, %s3
  $region1: #{tpu_custom_call.1} parent=0
    #allocation2 [shape = 'u8[512]{0}', space=vmem, size = 0x400, scoped, tag = 'output window, operand 0, single buffered']
    #allocation3 [shape = 's32[1]{0}', space=sflag, size = 0x4, scoped, tag = 'scoped memory for tpu_custom_call.1']
    %7 = vsyncpa [#allocation3], 0
    // Predicated region
    $region2: #{tpu_custom_call.1} parent=1 // pred_check
      _
    $region3: #{tpu_custom_call.1} parent=1 // pred_check_branch
      %9 = sbr.rel (0) target = $region5
    $region4: #{tpu_custom_call.1} parent=1 // pred_region
      _
    $region5: #{tpu_custom_call.1} parent=1 // pred_fallthru
      _
    // Predicated region
    $region6: #{tpu_custom_call.1} parent=1 // pred_check
      _
    $region7: #{tpu_custom_call.1} parent=1 // pred_check_branch
      %11 = sbr.rel (0) target = $region9
    $region8: #{tpu_custom_call.1} parent=1 // pred_region
      _
    $region9: #{tpu_custom_call.1} parent=1 // pred_fallthru
      _
    %v12 = vld [vmem:[%s0] sm:$0xff]
    %v13 = vld [vmem:[%s0 + $0x8] sm:$0xff]
    %v14 = vld [vmem:[%s0 + $0x10] sm:$0xff]
    %v15 = vld [vmem:[%s0 + $0x18] sm:$0xff]
    %v16 = vld [vmem:[%s0 + $0x20] sm:$0xff]
    %v17 = vld [vmem:[%s0 + $0x28] sm:$0xff]
    %v18 = vld [vmem:[%s0 + $0x30] sm:$0xff]
    %v19 = vld [vmem:[%s0 + $0x38] sm:$0xff]
    %v20 = vld [vmem:[%s0 + $0x40] sm:$0xff]
    %v21 = vld [vmem:[%s0 + $0x48] sm:$0xff]
    %v22 = vld [vmem:[%s0 + $0x50] sm:$0xff]
    %v23 = vld [vmem:[%s0 + $0x58] sm:$0xff]
    %v24 = vld [vmem:[%s0 + $0x60] sm:$0xff]
    %v25 = vld [vmem:[%s0 + $0x68] sm:$0xff]
    %v26 = vld [vmem:[%s0 + $0x70] sm:$0xff]
    %v27 = vld [vmem:[%s0 + $0x78] sm:$0xff]
    %v28 = vld [vmem:[%s1] sm:$0xff]
    %v29 = vld [vmem:[%s1 + $0x8] sm:$0xff]
    %v30 = vld [vmem:[%s1 + $0x10] sm:$0xff]
    %v31 = vld [vmem:[%s1 + $0x18] sm:$0xff]
    %33 = vset.pattern.permute.xlu0 16
    %34 = vperm.xlu0 %33, %v28
    %v35 = vpop.permute.xlu0 %34
    %38 = vset.pattern.permute.xlu0 16
    %39 = vperm.xlu0 %38, %v29
    %v40 = vpop.permute.xlu0 %39
    %43 = vset.pattern.permute.xlu0 16
    %44 = vperm.xlu0 %43, %v30
    %v45 = vpop.permute.xlu0 %44
    %48 = vset.pattern.permute.xlu0 16
    %49 = vperm.xlu0 %48, %v31
    %v50 = vpop.permute.xlu0 %49
    %vm52 = vcmask 130048
    %v53 = vsel %vm52, %v28, 0
    %v55 = vsel %vm52, %v29, 0
    %v57 = vsel %vm52, %v30, 0
    %v59 = vsel %vm52, %v31, 0
    %v62 = vsel %vm52, %v12, 0
    %v65 = vsel %vm52, %v13, 0
    %v68 = vsel %vm52, %v14, 0
    %v71 = vsel %vm52, %v15, 0
    %v74 = vsel %vm52, %v16, 0
    %v77 = vsel %vm52, %v17, 0
    %v80 = vsel %vm52, %v18, 0
    %v83 = vsel %vm52, %v19, 0
    %v86 = vsel %vm52, %v20, 0
    %v89 = vsel %vm52, %v21, 0
    %v92 = vsel %vm52, %v22, 0
    %v95 = vsel %vm52, %v23, 0
    %v98 = vsel %vm52, %v24, 0
    %v101 = vsel %vm52, %v25, 0
    %v104 = vsel %vm52, %v26, 0
    %v107 = vsel %vm52, %v27, 0
    %109 = vmatpush.xpose.msra.mxu0 %v107
    %110 = vmatpush.xpose.msra.mxu0 %v104
    %111 = vmatpush.xpose.msra.mxu0 %v101
    %112 = vmatpush.xpose.msra.mxu0 %v98
    %113 = vmatpush.xpose.msra.mxu0 %v95
    %114 = vmatpush.xpose.msra.mxu0 %v92
    %115 = vmatpush.xpose.msra.mxu0 %v89
    %116 = vmatpush.xpose.msra.mxu0 %v86
    %117 = vmatpush.xpose.msra.mxu0 %v83
    %118 = vmatpush.xpose.msra.mxu0 %v80
    %119 = vmatpush.xpose.msra.mxu0 %v77
    %120 = vmatpush.xpose.msra.mxu0 %v74
    %121 = vmatpush.xpose.msra.mxu0 %v71
    %122 = vmatpush.xpose.msra.mxu0 %v68
    %123 = vmatpush.xpose.msra.mxu0 %v65
    %124 = vmatpush.xpose.msra.mxu0 %v62
    %125 = vmatmul.f32.gmra.mxu0 %v53
    %v126 = vpop.f32.mrf.mxu0
    %v127 = vadd.f32 %v35, %v126
    %128 = vmatmul.f32.gmra.mxu0 %v55
    %v129 = vpop.f32.mrf.mxu0
    %v130 = vadd.f32 %v40, %v129
    %131 = vmatmul.f32.gmra.mxu0 %v57
    %v132 = vpop.f32.mrf.mxu0
    %v133 = vadd.f32 %v45, %v132
    %134 = vmatmul.f32.gmra.mxu0 %v59
    %v135 = vpop.f32.mrf.mxu0
    %v136 = vadd.f32 %v50, %v135
    %137 = vdwg.mxu0
    %v138 = vmax.f32 %v127, 0.0
    %v139 = vmax.f32 %v130, 0.0
    %v140 = vmax.f32 %v133, 0.0
    %v141 = vmax.f32 %v136, 0.0
    %v142 = vld [vmem:[%s1 + $0x20] sm:$0xff]
    %v143 = vld [vmem:[%s1 + $0x28] sm:$0xff]
    %v144 = vld [vmem:[%s1 + $0x30] sm:$0xff]
    %v145 = vld [vmem:[%s1 + $0x38] sm:$0xff]
    %147 = vset.pattern.permute.xlu0 32
    %148 = vperm.xlu0 %147, %v142
    %v149 = vpop.permute.xlu0 %148
    %152 = vset.pattern.permute.xlu0 32
    %153 = vperm.xlu0 %152, %v143
    %v154 = vpop.permute.xlu0 %153
    %157 = vset.pattern.permute.xlu0 32
    %158 = vperm.xlu0 %157, %v144
    %v159 = vpop.permute.xlu0 %158
    %162 = vset.pattern.permute.xlu0 32
    %163 = vperm.xlu0 %162, %v145
    %v164 = vpop.permute.xlu0 %163
    %vm166 = vcmask 261120
    %v167 = vsel %vm166, %v142, 0
    %v169 = vsel %vm166, %v143, 0
    %v171 = vsel %vm166, %v144, 0
    %v173 = vsel %vm166, %v145, 0
    %175 = vmatpush.msra.mxu0 0.0
    %176 = vmatpush.msra.mxu0 0.0
    %177 = vmatpush.msra.mxu0 0.0
    %178 = vmatpush.msra.mxu0 0.0
    %179 = vmatpush.msra.mxu0 0.0
    %180 = vmatpush.msra.mxu0 0.0
    %181 = vmatpush.msra.mxu0 0.0
    %182 = vmatpush.msra.mxu0 0.0
    %183 = vmatpush.msra.mxu0 0.0
    %184 = vmatpush.msra.mxu0 0.0
    %185 = vmatpush.msra.mxu0 0.0
    %186 = vmatpush.msra.mxu0 0.0
    %187 = vmatpush.msra.mxu0 %v141
    %188 = vmatpush.msra.mxu0 %v140
    %189 = vmatpush.msra.mxu0 %v139
    %190 = vmatpush.msra.mxu0 %v138
    %191 = vmatmul.f32.gmra.mxu0 %v167
    %v192 = vpop.f32.mrf.mxu0
    %v193 = vadd.f32 %v149, %v192
    %194 = vmatmul.f32.gmra.mxu0 %v169
    %v195 = vpop.f32.mrf.mxu0
    %v196 = vadd.f32 %v154, %v195
    %197 = vmatmul.f32.gmra.mxu0 %v171
    %v198 = vpop.f32.mrf.mxu0
    %v199 = vadd.f32 %v159, %v198
    %200 = vmatmul.f32.gmra.mxu0 %v173
    %v201 = vpop.f32.mrf.mxu0
    %v202 = vadd.f32 %v164, %v201
    %203 = vdwg.mxu0
    %v204 = vtanh.pop %v193
    %v205 = vtanh.pop %v196
    %v206 = vtanh.pop %v199
    %v207 = vtanh.pop %v202
    %v208 = vld [vmem:[%s1 + $0x40] sm:$0x1]
    %210 = vset.pattern.permute.xlu0 32
    %211 = vperm.xlu0 %210, %v208
    %v212 = vpop.permute.xlu0 %211
    %v214 = vsel %vm166, %v208, 0
    %216 = vmatpush.msra.mxu0 0.0
    %217 = vmatpush.msra.mxu0 0.0
    %218 = vmatpush.msra.mxu0 0.0
    %219 = vmatpush.msra.mxu0 0.0
    %220 = vmatpush.msra.mxu0 0.0
    %221 = vmatpush.msra.mxu0 0.0
    %222 = vmatpush.msra.mxu0 0.0
    %223 = vmatpush.msra.mxu0 0.0
    %224 = vmatpush.msra.mxu0 0.0
    %225 = vmatpush.msra.mxu0 0.0
    %226 = vmatpush.msra.mxu0 0.0
    %227 = vmatpush.msra.mxu0 0.0
    %228 = vmatpush.msra.mxu0 %v207
    %229 = vmatpush.msra.mxu0 %v206
    %230 = vmatpush.msra.mxu0 %v205
    %231 = vmatpush.msra.mxu0 %v204
    %232 = vmatmul.f32.gmra.mxu0 %v214
    %v233 = vpop.f32.mrf.mxu0
    %v234 = vadd.f32 %v212, %v233
    %235 = vdwg.mxu0
    %236 = vst [vmem:[#allocation2] sm:$0x1] %v234
    // Predicated region
    $region10: #{tpu_custom_call.1} parent=1 // pred_check
      _
    $region11: #{tpu_custom_call.1} parent=1 // pred_check_branch
      %238 = sbr.rel (0) target = $region13
    $region12: #{tpu_custom_call.1} parent=1 // pred_region
      %240 = vsyncadd [#allocation3], 0
      %s242 = sshll.u32 [#allocation2], 4
      %s243 = int_to_ptr.vmem [resolvable:$true] %s242
      %s244 = sshll.u32 %s2, 4
      %s245 = int_to_ptr.hbm [resolvable:$true] %s244
      %247 = dma.vmem_to_hbm [thread:$0]  %s243, 16, %s245, [#allocation3]
    $region13: #{tpu_custom_call.1} parent=1 // pred_fallthru
      _
    // Predicated region
    $region14: #{tpu_custom_call.1} parent=1 // pred_check
      _
    $region15: #{tpu_custom_call.1} parent=1 // pred_check_branch
      %249 = sbr.rel (0) target = $region17
    $region16: #{tpu_custom_call.1} parent=1 // pred_region
      %251 = dma.done [#allocation3], 16
    $region17: #{tpu_custom_call.1} parent=1 // pred_fallthru
      _
    %252 = vsyncpa [#allocation3], 1

</llo_original>
